<compile_context>
chip_gen: v7x
topology: tpu7x:2x2x1
jax: 0.10.0
libtpu: 0.0.40
codegen_flags: <defaults>
</compile_context>

<pallas_src>
import functools

import jax
import jax.numpy as jnp
from jax.experimental import pallas as pl
from jax.experimental.pallas import tpu as pltpu

_LANE = 128


def _round_up(n, m):
    return ((n + m - 1) // m) * m


def _mlp_kernel(x_ref, w1_ref, b1_ref, w2_ref, b2_ref, w3_ref, b3_ref, o_ref):
    """relu(relu(x@W1+b1)@W2+b2)@W3+b3 for one batch tile.

    x arrives f32 and is cast to bf16 in-kernel (no wrapper pass over x).
    Matmul operands are bf16 (MXU fast path); accumulation, bias-add and ReLU
    are f32.
    """
    x = x_ref[...].astype(w1_ref.dtype)

    h1 = jnp.dot(x, w1_ref[...], preferred_element_type=jnp.float32)
    h1 = jnp.maximum(h1 + b1_ref[...], 0.0).astype(w2_ref.dtype)

    h2 = jnp.dot(h1, w2_ref[...], preferred_element_type=jnp.float32)
    h2 = jnp.maximum(h2 + b2_ref[...], 0.0).astype(w3_ref.dtype)

    out = jnp.dot(h2, w3_ref[...], preferred_element_type=jnp.float32) + b3_ref[...]
    o_ref[...] = out.astype(o_ref.dtype)


def _pad2d(a, rows, cols, dtype):
    a = jnp.asarray(a, dtype)
    return jnp.pad(a, ((0, rows - a.shape[0]), (0, cols - a.shape[1])))


def prepare_params(params):
    """One-time padding/casting of the call-invariant weights and biases.

    The hidden dim is zero-padded to a 128-lane multiple (padded units stay
    exactly zero through bias-add/ReLU and contribute nothing downstream, so
    semantics are unchanged).  Weights become bf16 MXU operands, biases stay
    f32.  Call this once; per-call forwards then pay zero pad/convert traffic.
    """
    D, H = params["w1"].shape
    Y = params["w3"].shape[1]
    Hp = _round_up(H, _LANE)
    bf16, f32 = jnp.bfloat16, jnp.float32
    return {
        "w1": _pad2d(params["w1"], D, Hp, bf16),
        "b1": _pad2d(params["b1"], 1, Hp, f32),
        "w2": _pad2d(params["w2"], Hp, Hp, bf16),
        "b2": _pad2d(params["b2"], 1, Hp, f32),
        "w3": _pad2d(params["w3"], Hp, Y, bf16),
        "b3": _pad2d(params["b3"], 1, Y, f32),
    }


def _pick_batch_tile(B, Hp, batch_tile):
    """Batch-tile heuristic (all values static at trace time)."""
    if B < 256:
        # Smallest legal tile (8-row sublane granularity for the f32 x/out
        # blocks); no 256-row floor, so tiny batches do tiny work.
        bt = _round_up(B, 8)
    else:
        # >=2 grid steps so dimension_semantics=("parallel",) can shard across
        # v7x's two TensorCores; 128-row granularity is MXU-clean on v5e too.
        bt = min(batch_tile, _round_up(-(-B // 2), 128))
    if Hp >= 2048:
        # Cap the f32 h1/h2 intermediates (bt*Hp*4 each) for v7x's 64 MiB VMEM.
        bt = min(bt, 256)
    return bt


def _vmem_limit_bytes(bt, D, Hp, Y):
    """Right-sized VMEM request instead of a blanket 48 MiB."""

    def tile(r, c, itemsize):
        return _round_up(r, 8) * _round_up(c, _LANE) * itemsize

    need = 0
    need += 2 * tile(bt, D, 4)                                   # x, double-buffered f32
    need += 2 * tile(bt, Y, 4)                                   # out, double-buffered f32
    need += tile(D, Hp, 2) + tile(Hp, Hp, 2) + tile(Hp, Y, 2)    # weights (Buffered(1))
    need += 2 * tile(1, Hp, 4) + tile(1, Y, 4)                   # biases
    need += 2 * tile(bt, Hp, 4)                                  # f32 h1/h2
    need += 2 * tile(bt, Hp, 2) + tile(bt, D, 2)                 # bf16 copies
    # 2x headroom for compiler scratch / layout padding; floor well above real
    # need, cap at a value safe on every generation's physical VMEM.
    return int(min(48 * 1024 * 1024, max(16 * 1024 * 1024, 2 * need)))


@functools.partial(jax.jit, static_argnames=("batch_tile",))
def hardnet_cvx_forward(x, prepared, *, batch_tile=512):
    """HardNetCvx MLP forward via a single fused Pallas kernel.

    x:        [B, enc_xdim] float32
    prepared: output of prepare_params() (padded bf16 weights, f32 biases)
    returns:  [B, ydim] float32
    """
    B, D = x.shape
    Hp = prepared["w2"].shape[0]
    Y = prepared["w3"].shape[1]
    assert prepared["w1"].shape[0] == D, "prepared params do not match x feature dim"

    bt = _pick_batch_tile(B, Hp, batch_tile)
    grid = (pl.cdiv(B, bt),)        # ragged last tile is masked; x is never padded/copied

    rowblk = lambda i: (i, 0)       # x / out: tile over the batch dim
    const = lambda i: (0, 0)        # weights/biases: resident block, never re-DMA'd

    def wspec(shape):
        # Constant index_map -> fetched once; the default second pipeline
        # buffer would be dead VMEM (matters on v7x at large hiddenSize).
        return pl.BlockSpec(shape, const, pipeline_mode=pl.Buffered(1))

    flops = 2 * B * (D * Hp + Hp * Hp + Hp * Y)
    bytes_accessed = int(
        x.size * x.dtype.itemsize
        + sum(int(v.size) * v.dtype.itemsize for v in prepared.values())
        + B * Y * 4
    )

    return pl.pallas_call(
        _mlp_kernel,
        out_shape=jax.ShapeDtypeStruct((B, Y), jnp.float32),
        grid_spec=pltpu.PrefetchScalarGridSpec(
            num_scalar_prefetch=0,
            grid=grid,
            in_specs=[
                pl.BlockSpec((bt, D), rowblk),   # x (f32; cast to bf16 in-kernel)
                wspec((D, Hp)),                  # w1
                wspec((1, Hp)),                  # b1
                wspec((Hp, Hp)),                 # w2
                wspec((1, Hp)),                  # b2
                wspec((Hp, Y)),                  # w3
                wspec((1, Y)),                   # b3
            ],
            out_specs=pl.BlockSpec((bt, Y), rowblk),
        ),
        compiler_params=pltpu.CompilerParams(
            # batch steps are independent -> shard across v7x's 2 TensorCores
            dimension_semantics=("parallel",),
            vmem_limit_bytes=_vmem_limit_bytes(bt, D, Hp, Y),
        ),
        cost_estimate=pl.CostEstimate(
            flops=int(flops), transcendentals=0, bytes_accessed=bytes_accessed),
    )(x, prepared["w1"], prepared["b1"], prepared["w2"], prepared["b2"],
      prepared["w3"], prepared["b3"])


def init_params(key, enc_xdim, hidden, ydim):
    """Deterministic kaiming-normal weights (fan_in), zero biases (f32)."""
    k1, k2, k3 = jax.random.split(key, 3)

    def kaiming(k, fan_in, fan_out):
        std = jnp.sqrt(2.0 / fan_in)
        # stored as [in, out] (transposed relative to torch's [out, in])
        return jax.random.normal(k, (fan_in, fan_out), dtype=jnp.float32) * std

    return {
        "w1": kaiming(k1, enc_xdim, hidden),
        "b1": jnp.zeros((1, hidden), jnp.float32),
        "w2": kaiming(k2, hidden, hidden),
        "b2": jnp.zeros((1, hidden), jnp.float32),
        "w3": kaiming(k3, hidden, ydim),
        "b3": jnp.zeros((1, ydim), jnp.float32),
    }


def _reference_f32(x, p):
    """Pure f32 module semantics."""
    h = jnp.maximum(x @ p["w1"] + p["b1"], 0.0)
    h = jnp.maximum(h @ p["w2"] + p["b2"], 0.0)
    return h @ p["w3"] + p["b3"]


def _reference_bf16(x, p):
    """Exact math of the kernel: bf16 matmul operands, f32 accumulation."""
    bf, f32 = jnp.bfloat16, jnp.float32
    h = jnp.dot(x.astype(bf), p["w1"].astype(bf), preferred_element_type=f32)
    h = jnp.maximum(h + p["b1"], 0.0).astype(bf)
    h2 = jnp.dot(h, p["w2"].astype(bf), preferred_element_type=f32)
    h2 = jnp.maximum(h2 + p["b2"], 0.0).astype(bf)
    return jnp.dot(h2, p["w3"].astype(bf), preferred_element_type=f32) + p["b3"]


if __name__ == "__main__":
    # small shapes consistent with the module:
    #   data.encoded_xdim = 32, args['hiddenSize'] = 32, data.ydim = 16, batch = 8
    B, ENC_XDIM, HIDDEN, YDIM = 8, 32, 32, 16

    key = jax.random.PRNGKey(0)
    kx, kp = jax.random.split(key)

    x = jax.random.normal(kx, (B, ENC_XDIM), dtype=jnp.float32)
    params = init_params(kp, ENC_XDIM, HIDDEN, YDIM)

    prepared = prepare_params(params)   # one-time pad/cast of call-invariant weights

    out = hardnet_cvx_forward(x, prepared)
    out = jax.block_until_ready(out)
    assert out.shape == (B, YDIM)
    assert out.dtype == jnp.float32

    # tight check against a reference that mirrors the kernel arithmetic
    ref_kernel = _reference_bf16(x, params)
    assert jnp.allclose(out, ref_kernel, atol=1e-3, rtol=1e-3)

    # loose check against the pure-f32 module semantics (bf16 MXU operands
    # introduce ~1e-2-level deviation, as expected)
    ref_f32 = _reference_f32(x, params)
    assert jnp.allclose(out, ref_f32, atol=1e-1, rtol=1e-1)

    print("KERNEL_OK")
</pallas_src>

<mosaic_0001>
module attributes {stable_mosaic.version = 11 : i64} {
  func.func @_mlp_kernel(%arg0: i32, %arg1: memref<8x32xf32, #tpu.memory_space<vmem>>, %arg2: memref<32x128xbf16, #tpu.memory_space<vmem>>, %arg3: memref<1x128xf32, #tpu.memory_space<vmem>>, %arg4: memref<128x128xbf16, #tpu.memory_space<vmem>>, %arg5: memref<1x128xf32, #tpu.memory_space<vmem>>, %arg6: memref<128x16xbf16, #tpu.memory_space<vmem>>, %arg7: memref<1x16xf32, #tpu.memory_space<vmem>>, %arg8: memref<8x16xf32, #tpu.memory_space<vmem>>) attributes {dimension_semantics = [#tpu.dimension_semantics<parallel>], iteration_bounds = array<i64: 1>, scalar_prefetch = 0 : i64, scratch_operands = 0 : i64, tpu.core_type = #tpu.core_type<tc>, window_params = [{transform_indices = @transform_0, window_bounds = array<i64: 8, 32>}, {pipeline_mode = #tpu.pipeline_mode<synchronous>, transform_indices = @transform_1, window_bounds = array<i64: 32, 128>}, {pipeline_mode = #tpu.pipeline_mode<synchronous>, transform_indices = @transform_2, window_bounds = array<i64: 1, 128>}, {pipeline_mode = #tpu.pipeline_mode<synchronous>, transform_indices = @transform_3, window_bounds = array<i64: 128, 128>}, {pipeline_mode = #tpu.pipeline_mode<synchronous>, transform_indices = @transform_4, window_bounds = array<i64: 1, 128>}, {pipeline_mode = #tpu.pipeline_mode<synchronous>, transform_indices = @transform_5, window_bounds = array<i64: 128, 16>}, {pipeline_mode = #tpu.pipeline_mode<synchronous>, transform_indices = @transform_6, window_bounds = array<i64: 1, 16>}, {transform_indices = @transform_7, window_bounds = array<i64: 8, 16>}]} {
    %c0 = arith.constant 0 : index
    %c0_0 = arith.constant 0 : index
    %0 = vector.load %arg1[%c0, %c0_0] : memref<8x32xf32, #tpu.memory_space<vmem>>, vector<8x32xf32>
    %1 = arith.truncf %0 : vector<8x32xf32> to vector<8x32xbf16>
    %c0_1 = arith.constant 0 : index
    %c0_2 = arith.constant 0 : index
    %2 = vector.load %arg2[%c0_1, %c0_2] : memref<32x128xbf16, #tpu.memory_space<vmem>>, vector<32x128xbf16>
    %cst = arith.constant dense<0.000000e+00> : vector<8x128xf32>
    %3 = tpu.matmul %1, %2, %cst {dimension_numbers = #tpu.dot_dimension_numbers<[1], [0], [0], [1], [0, 0, 1, 1], [], []>} : vector<8x32xbf16>, vector<32x128xbf16>, vector<8x128xf32> -> vector<8x128xf32>
    %c0_3 = arith.constant 0 : index
    %c0_4 = arith.constant 0 : index
    %4 = vector.load %arg3[%c0_3, %c0_4] : memref<1x128xf32, #tpu.memory_space<vmem>>, vector<1x128xf32>
    %5 = vector.broadcast %4 : vector<1x128xf32> to vector<8x128xf32>
    %6 = arith.addf %3, %5 : vector<8x128xf32>
    %cst_5 = arith.constant 0.000000e+00 : f32
    %7 = vector.broadcast %cst_5 : f32 to vector<8x128xf32>
    %8 = arith.maximumf %6, %7 : vector<8x128xf32>
    %9 = arith.truncf %8 : vector<8x128xf32> to vector<8x128xbf16>
    %c0_6 = arith.constant 0 : index
    %c0_7 = arith.constant 0 : index
    %10 = vector.load %arg4[%c0_6, %c0_7] : memref<128x128xbf16, #tpu.memory_space<vmem>>, vector<128x128xbf16>
    %cst_8 = arith.constant dense<0.000000e+00> : vector<8x128xf32>
    %11 = tpu.matmul %9, %10, %cst_8 {dimension_numbers = #tpu.dot_dimension_numbers<[1], [0], [0], [1], [0, 0, 1, 1], [], []>} : vector<8x128xbf16>, vector<128x128xbf16>, vector<8x128xf32> -> vector<8x128xf32>
    %c0_9 = arith.constant 0 : index
    %c0_10 = arith.constant 0 : index
    %12 = vector.load %arg5[%c0_9, %c0_10] : memref<1x128xf32, #tpu.memory_space<vmem>>, vector<1x128xf32>
    %13 = vector.broadcast %12 : vector<1x128xf32> to vector<8x128xf32>
    %14 = arith.addf %11, %13 : vector<8x128xf32>
    %cst_11 = arith.constant 0.000000e+00 : f32
    %15 = vector.broadcast %cst_11 : f32 to vector<8x128xf32>
    %16 = arith.maximumf %14, %15 : vector<8x128xf32>
    %17 = arith.truncf %16 : vector<8x128xf32> to vector<8x128xbf16>
    %c0_12 = arith.constant 0 : index
    %c0_13 = arith.constant 0 : index
    %18 = vector.load %arg6[%c0_12, %c0_13] : memref<128x16xbf16, #tpu.memory_space<vmem>>, vector<128x16xbf16>
    %cst_14 = arith.constant dense<0.000000e+00> : vector<8x16xf32>
    %19 = tpu.matmul %17, %18, %cst_14 {dimension_numbers = #tpu.dot_dimension_numbers<[1], [0], [0], [1], [0, 0, 1, 1], [], []>} : vector<8x128xbf16>, vector<128x16xbf16>, vector<8x16xf32> -> vector<8x16xf32>
    %c0_15 = arith.constant 0 : index
    %c0_16 = arith.constant 0 : index
    %20 = vector.load %arg7[%c0_15, %c0_16] : memref<1x16xf32, #tpu.memory_space<vmem>>, vector<1x16xf32>
    %21 = vector.broadcast %20 : vector<1x16xf32> to vector<8x16xf32>
    %22 = arith.addf %19, %21 : vector<8x16xf32>
    %c0_17 = arith.constant 0 : index
    %c0_18 = arith.constant 0 : index
    %23 = vector.load %arg8[%c0_17, %c0_18] : memref<8x16xf32, #tpu.memory_space<vmem>>, vector<8x16xf32>
    tpu.vector_store %arg8[%c0_17, %c0_18], %22 {strides = array<i32>} : memref<8x16xf32, #tpu.memory_space<vmem>>, vector<8x16xf32>,
    return
  }
  func.func @transform_0(%arg0: i32) -> (i32, i32) {
    %c0_i32 = arith.constant 0 : i32
    %c0_i32_0 = arith.constant 0 : i32
    return %arg0, %c0_i32 : i32, i32
  }
  func.func @transform_1(%arg0: i32) -> (i32, i32) {
    %c0_i32 = arith.constant 0 : i32
    %c0_i32_0 = arith.constant 0 : i32
    %c0_i32_1 = arith.constant 0 : i32
    return %c0_i32, %c0_i32_0 : i32, i32
  }
  func.func @transform_2(%arg0: i32) -> (i32, i32) {
    %c0_i32 = arith.constant 0 : i32
    %c0_i32_0 = arith.constant 0 : i32
    %c0_i32_1 = arith.constant 0 : i32
    return %c0_i32, %c0_i32_0 : i32, i32
  }
  func.func @transform_3(%arg0: i32) -> (i32, i32) {
    %c0_i32 = arith.constant 0 : i32
    %c0_i32_0 = arith.constant 0 : i32
    %c0_i32_1 = arith.constant 0 : i32
    return %c0_i32, %c0_i32_0 : i32, i32
  }
  func.func @transform_4(%arg0: i32) -> (i32, i32) {
    %c0_i32 = arith.constant 0 : i32
    %c0_i32_0 = arith.constant 0 : i32
    %c0_i32_1 = arith.constant 0 : i32
    return %c0_i32, %c0_i32_0 : i32, i32
  }
  func.func @transform_5(%arg0: i32) -> (i32, i32) {
    %c0_i32 = arith.constant 0 : i32
    %c0_i32_0 = arith.constant 0 : i32
    %c0_i32_1 = arith.constant 0 : i32
    return %c0_i32, %c0_i32_0 : i32, i32
  }
  func.func @transform_6(%arg0: i32) -> (i32, i32) {
    %c0_i32 = arith.constant 0 : i32
    %c0_i32_0 = arith.constant 0 : i32
    %c0_i32_1 = arith.constant 0 : i32
    return %c0_i32, %c0_i32_0 : i32, i32
  }
  func.func @transform_7(%arg0: i32) -> (i32, i32) {
    %c0_i32 = arith.constant 0 : i32
    %c0_i32_0 = arith.constant 0 : i32
    return %arg0, %c0_i32 : i32, i32
  }
}

</mosaic_0001>

<llo_original>
// kernel: hardnet_cvx_forward.1
$region0: #{hardnet_cvx_forward.1}
  #allocation0 [shape = 'u32[]', space=smem, size = 0x4, offset = 0x4, fixed_abs, tag = 'smem constant byte address 0x4 - core index']
  #allocation1 [shape = 'u32[144,128]{1,0:T(1,128)}', space=vmem, size = 0x12000, scoped, tag = 'internal scratch']
  %s0 = inlined_call_operand.hbm [shape: f32[8,32], index: 0, kind: input, shape index: {}]
  %s1 = inlined_call_operand.vmem [shape: bf16[32,128], index: 1, kind: input, shape index: {}]
  %s2 = inlined_call_operand.vmem [shape: f32[1,128], index: 2, kind: input, shape index: {}]
  %s3 = inlined_call_operand.vmem [shape: bf16[128,128], index: 3, kind: input, shape index: {}]
  %s4 = inlined_call_operand.vmem [shape: f32[1,128], index: 4, kind: input, shape index: {}]
  %s5 = inlined_call_operand.vmem [shape: bf16[128,16], index: 5, kind: input, shape index: {}]
  %s6 = inlined_call_operand.vmem [shape: f32[1,16], index: 6, kind: input, shape index: {}]
  %s7 = inlined_call_operand.hbm [shape: f32[8,16], index: 7, kind: output, shape index: {}]
  %s8 = sld [smem:[#allocation0]]
  $region42: #{hardnet_cvx_forward.1} parent=0
    _
  %s10 = ssub.s32 1, %s8
  %s11 = scalar_select 0, %s10, %s8
  $region1: #{hardnet_cvx_forward.1} parent=0
    #allocation2 [shape = 'u8[4096]{0}', space=vmem, size = 0x1000, scoped, tag = 'input window, operand 0, single buffered']
    #allocation3 [shape = 's32[1]{0}', space=sflag, size = 0x4, scoped, tag = 'scoped memory for hardnet_cvx_forward.1']
    #allocation4 [shape = 's32[1]{0}', space=sflag, size = 0x4, scoped, tag = 'scoped memory for hardnet_cvx_forward.1']
    #allocation5 [shape = 'u8[4096]{0}', space=vmem, size = 0x1000, scoped, tag = 'output window, operand 0, single buffered']
    %12 = vsyncpa [#allocation3], 0
    %13 = vsyncpa [#allocation4], 0
    // Predicated region
    $region2: #{hardnet_cvx_forward.1} parent=1 // pred_check
      _
    $region3: #{hardnet_cvx_forward.1} parent=1 // pred_check_branch
      %15 = sbr.rel (0) target = $region5
    $region4: #{hardnet_cvx_forward.1} parent=1 // pred_region
      %s17 = ssub.s32 128, 128
      %18 = vsyncadd [#allocation3], %s17
      %s20 = sshll.u32 [#allocation2], 4
      %s21 = int_to_ptr.vmem [resolvable:$true] %s20
      %23 = dma.hbm_to_vmem [thread:$0]  %s0, 128, %s21, [#allocation3]
    $region5: #{hardnet_cvx_forward.1} parent=1 // pred_fallthru
      _
    // Predicated region
    $region6: #{hardnet_cvx_forward.1} parent=1 // pred_check
      _
    $region7: #{hardnet_cvx_forward.1} parent=1 // pred_check_branch
      %25 = sbr.rel (0) target = $region9
    $region8: #{hardnet_cvx_forward.1} parent=1 // pred_region
      _
    $region9: #{hardnet_cvx_forward.1} parent=1 // pred_fallthru
      _
    // Predicated region
    $region10: #{hardnet_cvx_forward.1} parent=1 // pred_check
      _
    $region11: #{hardnet_cvx_forward.1} parent=1 // pred_check_branch
      %27 = sbr.rel (0) target = $region13
    $region12: #{hardnet_cvx_forward.1} parent=1 // pred_region
      _
    $region13: #{hardnet_cvx_forward.1} parent=1 // pred_fallthru
      _
    // Predicated region
    $region14: #{hardnet_cvx_forward.1} parent=1 // pred_check
      _
    $region15: #{hardnet_cvx_forward.1} parent=1 // pred_check_branch
      %29 = sbr.rel (0) target = $region17
    $region16: #{hardnet_cvx_forward.1} parent=1 // pred_region
      _
    $region17: #{hardnet_cvx_forward.1} parent=1 // pred_fallthru
      _
    // Predicated region
    $region18: #{hardnet_cvx_forward.1} parent=1 // pred_check
      _
    $region19: #{hardnet_cvx_forward.1} parent=1 // pred_check_branch
      %31 = sbr.rel (0) target = $region21
    $region20: #{hardnet_cvx_forward.1} parent=1 // pred_region
      _
    $region21: #{hardnet_cvx_forward.1} parent=1 // pred_fallthru
      _
    // Predicated region
    $region22: #{hardnet_cvx_forward.1} parent=1 // pred_check
      _
    $region23: #{hardnet_cvx_forward.1} parent=1 // pred_check_branch
      %33 = sbr.rel (0) target = $region25
    $region24: #{hardnet_cvx_forward.1} parent=1 // pred_region
      _
    $region25: #{hardnet_cvx_forward.1} parent=1 // pred_fallthru
      _
    // Predicated region
    $region26: #{hardnet_cvx_forward.1} parent=1 // pred_check
      _
    $region27: #{hardnet_cvx_forward.1} parent=1 // pred_check_branch
      %35 = sbr.rel (0) target = $region29
    $region28: #{hardnet_cvx_forward.1} parent=1 // pred_region
      _
    $region29: #{hardnet_cvx_forward.1} parent=1 // pred_fallthru
      _
    // Predicated region
    $region30: #{hardnet_cvx_forward.1} parent=1 // pred_check
      _
    $region31: #{hardnet_cvx_forward.1} parent=1 // pred_check_branch
      %37 = sbr.rel (0) target = $region33
    $region32: #{hardnet_cvx_forward.1} parent=1 // pred_region
      %38 = dma.done [#allocation3], 128
    $region33: #{hardnet_cvx_forward.1} parent=1 // pred_fallthru
      _
    %v40 = vld [vmem:[#allocation2] sm:$0xff]
    %v41 = vpack.c.bf16 %v40, %v40
    %v42 = vld [vmem:[%s1] sm:$0xf]
    %v43 = vld [vmem:[%s1 + $0x4] sm:$0xf]
    %v44 = vld [vmem:[%s1 + $0x8] sm:$0xf]
    %v45 = vld [vmem:[%s1 + $0xc] sm:$0xf]
    %v46 = vld [vmem:[%s2] sm:$0x1]
    %v48 = vlaneseq
    %v49 = vshrl.u32 %v48, 7
    %v50 = vsub.s32 0, %v49
    %v51 = vrot.slane %v46, %v50
    %v57 = vunpack.c.l.b16 %v42
    %v58 = vunpack.c.l.b16 %v43
    %v59 = vunpack.c.l.b16 %v44
    %v60 = vunpack.c.l.b16 %v45
    %v61 = vpack.c.b16 %v58, %v57
    %v62 = vpack.c.b16 %v60, %v59
    %vm65 = vcmask 261120
    %v67 = vsel %vm65, %v41, 0
    %69 = vmatprep.subr.bf16.mxu0 0
    %70 = vmatpush1.bf16.msra.mxu0 %v61
    %71 = vmatprep.subr.bf16.mxu0 0
    %72 = vmatpush1.bf16.msra.mxu0 %v62
    %73 = vmatprep.subr.bf16.mxu0 0
    %74 = vmatpush1.bf16.msra.mxu0 0
    %75 = vmatprep.subr.bf16.mxu0 0
    %76 = vmatpush1.bf16.msra.mxu0 0
    %77 = vmatprep.subr.bf16.mxu0 0
    %78 = vmatpush1.bf16.msra.mxu0 0
    %79 = vmatprep.subr.bf16.mxu0 0
    %80 = vmatpush1.bf16.msra.mxu0 0
    %81 = vmatprep.subr.bf16.mxu0 0
    %82 = vmatpush1.bf16.msra.mxu0 0
    %83 = vmatprep.subr.bf16.mxu0 0
    %84 = vmatpush1.bf16.msra.mxu0 0
    %85 = vmatprep.subr.bf16.mxu0 0
    %86 = vmatpush1.bf16.msra.mxu0 0
    %87 = vmatprep.subr.bf16.mxu0 0
    %88 = vmatpush1.bf16.msra.mxu0 0
    %89 = vmatprep.subr.bf16.mxu0 0
    %90 = vmatpush1.bf16.msra.mxu0 0
    %91 = vmatprep.subr.bf16.mxu0 0
    %92 = vmatpush1.bf16.msra.mxu0 0
    %93 = vmatprep.subr.bf16.mxu0 0
    %94 = vmatpush1.bf16.msra.mxu0 0
    %95 = vmatprep.subr.bf16.mxu0 0
    %96 = vmatpush1.bf16.msra.mxu0 0
    %97 = vmatprep.subr.bf16.mxu0 0
    %98 = vmatpush1.bf16.msra.mxu0 0
    %99 = vmatprep.subr.bf16.mxu0 0
    %100 = vmatpush1.bf16.msra.mxu0 0
    %101 = vmatprep.mubr.bf16.mxu0 0
    %102 = vmatmul.mubr.bf16.gmra.mrb[0].mxu0 %v67
    %v103 = vpop.f32.mrb[0].mxu0
    %v104 = vadd.f32 %v51, %v103
    %v105 = vpop.f32.mrb[0].mxu0
    %v106 = vpop.f32.mrb[0].mxu0
    %v107 = vpop.f32.mrb[0].mxu0
    %108 = vdwg.mxu0
    %v109 = vmax.f32 %v104, 0.0
    %v110 = vpack.c.bf16 %v109, %v109
    %v111 = vld [vmem:[%s3] sm:$0xf]
    %v112 = vld [vmem:[%s3 + $0x4] sm:$0xf]
    %v113 = vld [vmem:[%s3 + $0x8] sm:$0xf]
    %v114 = vld [vmem:[%s3 + $0xc] sm:$0xf]
    %v115 = vld [vmem:[%s3 + $0x10] sm:$0xf]
    %v116 = vld [vmem:[%s3 + $0x14] sm:$0xf]
    %v117 = vld [vmem:[%s3 + $0x18] sm:$0xf]
    %v118 = vld [vmem:[%s3 + $0x1c] sm:$0xf]
    %v119 = vld [vmem:[%s3 + $0x20] sm:$0xf]
    %v120 = vld [vmem:[%s3 + $0x24] sm:$0xf]
    %v121 = vld [vmem:[%s3 + $0x28] sm:$0xf]
    %v122 = vld [vmem:[%s3 + $0x2c] sm:$0xf]
    %v123 = vld [vmem:[%s3 + $0x30] sm:$0xf]
    %v124 = vld [vmem:[%s3 + $0x34] sm:$0xf]
    %v125 = vld [vmem:[%s3 + $0x38] sm:$0xf]
    %v126 = vld [vmem:[%s3 + $0x3c] sm:$0xf]
    %v127 = vld [vmem:[%s4] sm:$0x1]
    %v129 = vlaneseq
    %v130 = vshrl.u32 %v129, 7
    %v131 = vsub.s32 0, %v130
    %v132 = vrot.slane %v127, %v131
    %v150 = vunpack.c.l.b16 %v111
    %v151 = vunpack.c.l.b16 %v112
    %v152 = vunpack.c.l.b16 %v113
    %v153 = vunpack.c.l.b16 %v114
    %v154 = vunpack.c.l.b16 %v115
    %v155 = vunpack.c.l.b16 %v116
    %v156 = vunpack.c.l.b16 %v117
    %v157 = vunpack.c.l.b16 %v118
    %v158 = vunpack.c.l.b16 %v119
    %v159 = vunpack.c.l.b16 %v120
    %v160 = vunpack.c.l.b16 %v121
    %v161 = vunpack.c.l.b16 %v122
    %v162 = vunpack.c.l.b16 %v123
    %v163 = vunpack.c.l.b16 %v124
    %v164 = vunpack.c.l.b16 %v125
    %v165 = vunpack.c.l.b16 %v126
    %v166 = vpack.c.b16 %v151, %v150
    %v167 = vpack.c.b16 %v153, %v152
    %v168 = vpack.c.b16 %v155, %v154
    %v169 = vpack.c.b16 %v157, %v156
    %v170 = vpack.c.b16 %v159, %v158
    %v171 = vpack.c.b16 %v161, %v160
    %v172 = vpack.c.b16 %v163, %v162
    %v173 = vpack.c.b16 %v165, %v164
    %182 = vmatprep.subr.bf16.mxu0 0
    %183 = vmatpush1.bf16.msra.mxu0 %v166
    %184 = vmatprep.subr.bf16.mxu0 0
    %185 = vmatpush1.bf16.msra.mxu0 %v167
    %186 = vmatprep.subr.bf16.mxu0 0
    %187 = vmatpush1.bf16.msra.mxu0 %v168
    %188 = vmatprep.subr.bf16.mxu0 0
    %189 = vmatpush1.bf16.msra.mxu0 %v169
    %190 = vmatprep.subr.bf16.mxu0 0
    %191 = vmatpush1.bf16.msra.mxu0 %v170
    %192 = vmatprep.subr.bf16.mxu0 0
    %193 = vmatpush1.bf16.msra.mxu0 %v171
    %194 = vmatprep.subr.bf16.mxu0 0
    %195 = vmatpush1.bf16.msra.mxu0 %v172
    %196 = vmatprep.subr.bf16.mxu0 0
    %197 = vmatpush1.bf16.msra.mxu0 %v173
    %198 = vmatprep.subr.bf16.mxu0 0
    %199 = vmatpush1.bf16.msra.mxu0 0
    %200 = vmatprep.subr.bf16.mxu0 0
    %201 = vmatpush1.bf16.msra.mxu0 0
    %202 = vmatprep.subr.bf16.mxu0 0
    %203 = vmatpush1.bf16.msra.mxu0 0
    %204 = vmatprep.subr.bf16.mxu0 0
    %205 = vmatpush1.bf16.msra.mxu0 0
    %206 = vmatprep.subr.bf16.mxu0 0
    %207 = vmatpush1.bf16.msra.mxu0 0
    %208 = vmatprep.subr.bf16.mxu0 0
    %209 = vmatpush1.bf16.msra.mxu0 0
    %210 = vmatprep.subr.bf16.mxu0 0
    %211 = vmatpush1.bf16.msra.mxu0 0
    %212 = vmatprep.subr.bf16.mxu0 0
    %213 = vmatpush1.bf16.msra.mxu0 0
    %214 = vmatprep.mubr.bf16.mxu0 0
    %215 = vmatmul.mubr.bf16.gmra.mrb[0].mxu0 %v110
    %v216 = vpop.f32.mrb[0].mxu0
    %v217 = vadd.f32 %v132, %v216
    %v218 = vpop.f32.mrb[0].mxu0
    %v219 = vpop.f32.mrb[0].mxu0
    %v220 = vpop.f32.mrb[0].mxu0
    %221 = vdwg.mxu0
    %v222 = vmax.f32 %v217, 0.0
    %v223 = vpack.c.bf16 %v222, %v222
    %v224 = vld [vmem:[%s5] sm:$0xf]
    %v225 = vld [vmem:[%s5 + $0x4] sm:$0xf]
    %v226 = vld [vmem:[%s5 + $0x8] sm:$0xf]
    %v227 = vld [vmem:[%s5 + $0xc] sm:$0xf]
    %v228 = vld [vmem:[%s5 + $0x10] sm:$0xf]
    %v229 = vld [vmem:[%s5 + $0x14] sm:$0xf]
    %v230 = vld [vmem:[%s5 + $0x18] sm:$0xf]
    %v231 = vld [vmem:[%s5 + $0x1c] sm:$0xf]
    %v232 = vld [vmem:[%s5 + $0x20] sm:$0xf]
    %v233 = vld [vmem:[%s5 + $0x24] sm:$0xf]
    %v234 = vld [vmem:[%s5 + $0x28] sm:$0xf]
    %v235 = vld [vmem:[%s5 + $0x2c] sm:$0xf]
    %v236 = vld [vmem:[%s5 + $0x30] sm:$0xf]
    %v237 = vld [vmem:[%s5 + $0x34] sm:$0xf]
    %v238 = vld [vmem:[%s5 + $0x38] sm:$0xf]
    %v239 = vld [vmem:[%s5 + $0x3c] sm:$0xf]
    %v240 = vld [vmem:[%s6] sm:$0x1]
    %v242 = vlaneseq
    %v243 = vshrl.u32 %v242, 7
    %v244 = vsub.s32 0, %v243
    %v245 = vrot.slane %v240, %v244
    %v263 = vunpack.c.l.b16 %v224
    %v264 = vunpack.c.l.b16 %v225
    %v265 = vunpack.c.l.b16 %v226
    %v266 = vunpack.c.l.b16 %v227
    %v267 = vunpack.c.l.b16 %v228
    %v268 = vunpack.c.l.b16 %v229
    %v269 = vunpack.c.l.b16 %v230
    %v270 = vunpack.c.l.b16 %v231
    %v271 = vunpack.c.l.b16 %v232
    %v272 = vunpack.c.l.b16 %v233
    %v273 = vunpack.c.l.b16 %v234
    %v274 = vunpack.c.l.b16 %v235
    %v275 = vunpack.c.l.b16 %v236
    %v276 = vunpack.c.l.b16 %v237
    %v277 = vunpack.c.l.b16 %v238
    %v278 = vunpack.c.l.b16 %v239
    %v279 = vpack.c.b16 %v264, %v263
    %v280 = vpack.c.b16 %v266, %v265
    %v281 = vpack.c.b16 %v268, %v267
    %v282 = vpack.c.b16 %v270, %v269
    %v283 = vpack.c.b16 %v272, %v271
    %v284 = vpack.c.b16 %v274, %v273
    %v285 = vpack.c.b16 %v276, %v275
    %v286 = vpack.c.b16 %v278, %v277
    %295 = vmatprep.subr.bf16.mxu0 0
    %296 = vmatpush1.bf16.msra.mxu0 %v279
    %297 = vmatprep.subr.bf16.mxu0 0
    %298 = vmatpush1.bf16.msra.mxu0 %v280
    %299 = vmatprep.subr.bf16.mxu0 0
    %300 = vmatpush1.bf16.msra.mxu0 %v281
    %301 = vmatprep.subr.bf16.mxu0 0
    %302 = vmatpush1.bf16.msra.mxu0 %v282
    %303 = vmatprep.subr.bf16.mxu0 0
    %304 = vmatpush1.bf16.msra.mxu0 %v283
    %305 = vmatprep.subr.bf16.mxu0 0
    %306 = vmatpush1.bf16.msra.mxu0 %v284
    %307 = vmatprep.subr.bf16.mxu0 0
    %308 = vmatpush1.bf16.msra.mxu0 %v285
    %309 = vmatprep.subr.bf16.mxu0 0
    %310 = vmatpush1.bf16.msra.mxu0 %v286
    %311 = vmatprep.subr.bf16.mxu0 0
    %312 = vmatpush1.bf16.msra.mxu0 0
    %313 = vmatprep.subr.bf16.mxu0 0
    %314 = vmatpush1.bf16.msra.mxu0 0
    %315 = vmatprep.subr.bf16.mxu0 0
    %316 = vmatpush1.bf16.msra.mxu0 0
    %317 = vmatprep.subr.bf16.mxu0 0
    %318 = vmatpush1.bf16.msra.mxu0 0
    %319 = vmatprep.subr.bf16.mxu0 0
    %320 = vmatpush1.bf16.msra.mxu0 0
    %321 = vmatprep.subr.bf16.mxu0 0
    %322 = vmatpush1.bf16.msra.mxu0 0
    %323 = vmatprep.subr.bf16.mxu0 0
    %324 = vmatpush1.bf16.msra.mxu0 0
    %325 = vmatprep.subr.bf16.mxu0 0
    %326 = vmatpush1.bf16.msra.mxu0 0
    %327 = vmatprep.mubr.bf16.mxu0 0
    %328 = vmatmul.mubr.bf16.gmra.mrb[0].mxu0 %v223
    %v329 = vpop.f32.mrb[0].mxu0
    %v330 = vadd.f32 %v245, %v329
    %v331 = vpop.f32.mrb[0].mxu0
    %v332 = vpop.f32.mrb[0].mxu0
    %v333 = vpop.f32.mrb[0].mxu0
    %334 = vdwg.mxu0
    %vm335 = vcmask 130048
    %336 = vst.msk [vmem:[#allocation5] sm:$0xff] %vm335, %v330
    // Predicated region
    $region34: #{hardnet_cvx_forward.1} parent=1 // pred_check
      _
    $region35: #{hardnet_cvx_forward.1} parent=1 // pred_check_branch
      %338 = sbr.rel (0) target = $region37
    $region36: #{hardnet_cvx_forward.1} parent=1 // pred_region
      %s340 = ssub.s32 128, 128
      %341 = vsyncadd [#allocation4], %s340
      %s343 = sshll.u32 [#allocation5], 4
      %s344 = int_to_ptr.vmem [resolvable:$true] %s343
      %346 = dma.vmem_to_hbm [thread:$0]  %s344, 128, %s7, [#allocation4]
    $region37: #{hardnet_cvx_forward.1} parent=1 // pred_fallthru
      _
    // Predicated region
    $region38: #{hardnet_cvx_forward.1} parent=1 // pred_check
      _
    $region39: #{hardnet_cvx_forward.1} parent=1 // pred_check_branch
      %348 = sbr.rel (0) target = $region41
    $region40: #{hardnet_cvx_forward.1} parent=1 // pred_region
      %349 = dma.done [#allocation4], 128
    $region41: #{hardnet_cvx_forward.1} parent=1 // pred_fallthru
      _
    %350 = vsyncpa [#allocation3], 1
    %351 = vsyncpa [#allocation4], 1

</llo_original>
